<compile_context>
chip_gen: v5e
topology: v5e:2x2
jax: 0.10.0
libtpu: 0.0.40
codegen_flags: <defaults>
</compile_context>

<pallas_src>
import functools
import math

import jax
import jax.numpy as jnp
from jax.experimental import pallas as pl
from jax.experimental.pallas import tpu as pltpu

_LANE = 128
_SUB = 8
# Target HBM bytes per input stream per grid step (~85-86% roofline plateau,
# keeps per-step code size sane).
_TARGET_TILE_BYTES = 4 * 1024 * 1024
# Bound on how many row-groups are folded into the accumulator per step
# (keeps the generated add tree small).
_MAX_FOLD = 64


def _vmem_caps():
    """Returns (streaming_budget_bytes, vmem_limit_bytes) for this chip."""
    try:
        cap = int(pltpu.get_tpu_info().vmem_capacity_bytes)
    except Exception:  # not on TPU / API unavailable -> conservative (v7x) cap
        cap = 64 * 1024 * 1024
    budget = min(cap // 2, 40 * 1024 * 1024)
    limit = max(min(budget + 16 * 1024 * 1024, cap - 8 * 1024 * 1024),
                budget + 4 * 1024 * 1024)
    return budget, limit


def _pick_tile_rows(rows, row_vmem_bytes, row_hbm_bytes, budget_bytes, target_bytes):
    """Largest multiple-of-8 row tile within the VMEM budget / HBM target."""
    fixed = 2 * 1024 * 1024  # accumulator + output + misc headroom
    max_tr = max((budget_bytes - fixed) // max(row_vmem_bytes, 1), _SUB)
    tgt_tr = max(target_bytes // max(row_hbm_bytes, 1), _SUB)
    tr = int(min(max_tr, tgt_tr))
    tr -= tr % _SUB
    tr = max(tr, _SUB)
    if tr >= rows:
        return rows  # single full-extent block (allowed even if rows % 8 != 0)
    # Prefer a multiple-of-8 divisor of rows so no step ever needs a tail mask.
    if rows % _SUB == 0:
        r8 = rows // _SUB
        for d in range(tr // _SUB, 0, -1):
            if r8 % d == 0:
                cand = d * _SUB
                if 2 * cand >= tr:  # do not shrink tiles too much for this
                    return cand
                break
    return tr


def _pick_acc_rows(tile_rows):
    """Accumulator row count: multiple-of-8 divisor of tile_rows, fold <= 64."""
    if tile_rows % _SUB != 0:
        return tile_rows
    m = tile_rows // _SUB
    a = (m + _MAX_FOLD - 1) // _MAX_FOLD
    while m % a != 0:
        a += 1
    return a * _SUB


def _wmse_kernel(*refs, mode, rows, tile_rows, tiles_per_split, acc_rows,
                 inv_n, needs_tail):
    if mode == "none":
        x_ref, t_ref, o_ref, acc_ref = refs
        w_ref = None
    else:
        w_ref, x_ref, t_ref, o_ref, acc_ref = refs

    c = pl.program_id(0)   # core split (parallel)
    i = pl.program_id(1)   # row-tile step (arbitrary / reduction)

    @pl.when(i == 0)
    def _():
        acc_ref[...] = jnp.zeros_like(acc_ref)

    # Hot path: pure VPU elementwise work.
    xf = x_ref[...].astype(jnp.float32)
    tf = t_ref[...].astype(jnp.float32)
    if mode == "full":
        wf = w_ref[...].astype(jnp.float32)
        d = xf * wf - tf * wf            # literal PyTorch formulation
        contrib = d * d
    else:
        d = xf - tf
        contrib = d * d
        if mode == "row":
            # (x*w - t*w)^2 == w^2 * (x - t)^2 with w constant per row.
            contrib = contrib * w_ref[...]   # (tile_rows, 1) broadcasts on lanes

    fold = tile_rows // acc_rows

    def _accumulate(v):
        if fold > 1:
            # Layout-preserving multiple-of-8 sublane slices -> plain vreg adds.
            part = v[0:acc_rows, :]
            for j in range(1, fold):
                part = part + v[j * acc_rows:(j + 1) * acc_rows, :]
            acc_ref[...] += part
        else:
            acc_ref[...] += v

    if needs_tail:
        row_base = (c * tiles_per_split + i) * tile_rows
        is_full = row_base + tile_rows <= rows

        @pl.when(is_full)
        def _():
            _accumulate(contrib)

        @pl.when(jnp.logical_not(is_full))
        def _():
            ridx = jax.lax.broadcasted_iota(jnp.int32, (tile_rows, 1), 0) + row_base
            # where-select (not multiply-by-zero) so OOB garbage cannot leak.
            _accumulate(jnp.where(ridx < rows, contrib, 0.0))
    else:
        _accumulate(contrib)

    @pl.when(i == tiles_per_split - 1)
    def _():
        total = jnp.sum(acc_ref[...]) * jnp.float32(inv_n)
        o_ref[...] = jnp.broadcast_to(jnp.reshape(total, (1, 1)), o_ref.shape)


def weighted_mse_loss(inp, target, weight=None, *, tile_bytes=None, max_splits=2):
    """Equivalent of WeightedMSELoss.forward (F.mse_loss, reduction='mean')."""
    inp = jnp.asarray(inp)
    target = jnp.asarray(target)
    assert inp.shape == target.shape, "input and target must have the same shape"
    ndim = inp.ndim

    mode = "none"
    x_src, t_src, w_src = inp, target, None
    row_scale = None

    if weight is not None:
        w = jnp.asarray(weight)
        k = ndim - w.ndim
        fast = False
        if k >= 0 and ndim >= 2:
            aligned = (1,) * k + tuple(w.shape)
            min_split = 0
            for d in range(ndim - 1, -1, -1):
                if aligned[d] != 1:
                    min_split = d + 1
                    break
            # Weight constant across the last two (spatial) dims -> compress
            # to one w^2 value per (leading-dims) row.
            fast = min_split <= ndim - 2
        if fast:
            split = ndim - 2
            rows = math.prod(inp.shape[:split]) if split > 0 else 1
            wf = jnp.broadcast_to(
                w.astype(jnp.float32).reshape((1,) * k + tuple(w.shape)),
                inp.shape[:split] + (1,) * (ndim - split),
            ).reshape(rows, 1)
            row_scale = wf * wf
            mode = "row"
        else:
            # Weight varies inside the trailing dims (or has more dims than
            # the input): stream the broadcast weight through the kernel.
            bshape = jnp.broadcast_shapes(inp.shape, w.shape)
            x_src = jnp.broadcast_to(inp, bshape)
            t_src = jnp.broadcast_to(target, bshape)
            w_src = jnp.broadcast_to(w, bshape)
            mode = "full"

    n_elems = int(x_src.size)
    shape = tuple(x_src.shape)

    # Choose a lane-dense 2-D view.
    if mode == "row":
        rows = int(row_scale.shape[0])
        cols = n_elems // rows
        # TODO(synk): when cols (= H*W) is not a multiple of 128 this slab is
        # lane-sparse; a lane-dense regrouping needs a finer-grained scale.
    elif n_elems % _LANE == 0:
        cols = _LANE
        rows = n_elems // _LANE
    elif len(shape) >= 2:
        cols = shape[-1]
        rows = n_elems // cols
    else:
        rows, cols = 1, max(n_elems, 1)

    x2d = x_src.reshape(rows, cols)
    t2d = t_src.reshape(rows, cols)

    # Dtype-aware tile sizing inside a per-generation VMEM budget.
    cols_pad = -(-cols // _LANE) * _LANE
    per_row_hbm = cols * x_src.dtype.itemsize
    per_row_buf = cols_pad * (x_src.dtype.itemsize + t_src.dtype.itemsize)
    if mode == "full":
        per_row_buf += cols_pad * w_src.dtype.itemsize
    row_vmem = 2 * per_row_buf                       # double-buffered streams
    if mode == "row":
        row_vmem += 2 * 512                          # lane-padded (tr, 1) f32

    budget, vmem_limit = _vmem_caps()
    target_bytes = int(tile_bytes) if tile_bytes is not None else _TARGET_TILE_BYTES
    tile_rows = _pick_tile_rows(rows, row_vmem, per_row_hbm, budget, target_bytes)
    acc_rows = _pick_acc_rows(tile_rows)

    total_tiles = -(-rows // tile_rows)
    n_splits = min(max(int(max_splits), 1), total_tiles)
    tiles_per_split = -(-total_tiles // n_splits)
    has_dummy = tiles_per_split * n_splits != total_tiles
    needs_tail = (rows % tile_rows != 0) or has_dummy
    last_tile = total_tiles - 1

    def row_block(c, s):
        t = c * tiles_per_split + s
        if has_dummy:
            t = jnp.minimum(t, last_tile)   # dummy steps re-read the last tile
        return t

    data_spec = pl.BlockSpec((tile_rows, cols), lambda c, s: (row_block(c, s), 0))

    in_specs = []
    operands = []
    if mode == "row":
        in_specs.append(pl.BlockSpec((tile_rows, 1), lambda c, s: (row_block(c, s), 0)))
        operands.append(row_scale)
    elif mode == "full":
        in_specs.append(data_spec)
        operands.append(w_src.reshape(rows, cols))
    in_specs += [data_spec, data_spec]
    operands += [x2d, t2d]

    kernel = functools.partial(
        _wmse_kernel,
        mode=mode,
        rows=rows,
        tile_rows=tile_rows,
        tiles_per_split=tiles_per_split,
        acc_rows=acc_rows,
        inv_n=1.0 / float(n_elems),
        needs_tail=needs_tail,
    )

    out = pl.pallas_call(
        kernel,
        out_shape=jax.ShapeDtypeStruct((n_splits * _SUB, _LANE), jnp.float32),
        grid_spec=pltpu.PrefetchScalarGridSpec(
            num_scalar_prefetch=0,
            grid=(n_splits, tiles_per_split),
            in_specs=in_specs,
            # Lane-dense per-core output block (one (8,128) tile per core).
            out_specs=pl.BlockSpec((_SUB, _LANE), lambda c, s: (c, 0)),
            scratch_shapes=[pltpu.VMEM((acc_rows, cols), jnp.float32)],
        ),
        compiler_params=pltpu.CompilerParams(
            dimension_semantics=("parallel", "arbitrary"),
            vmem_limit_bytes=int(vmem_limit),
        ),
    )(*operands)

    partials = out.reshape(n_splits, _SUB, _LANE)[:, 0, 0]
    return jnp.sum(partials)


if __name__ == "__main__":
    key = jax.random.PRNGKey(0)
    ks = jax.random.split(key, 8)

    # 1) Channel-weighted MSE (the module's typical use) -> fast row-scale path.
    B, C, H, W = 2, 4, 16, 16
    x = jax.random.normal(ks[0], (B, C, H, W), dtype=jnp.float32)
    tgt = jax.random.normal(ks[1], (B, C, H, W), dtype=jnp.float32)
    weight = 0.5 + jax.random.uniform(ks[2], (1, C, 1, 1), dtype=jnp.float32)
    got = weighted_mse_loss(x, tgt, weight)
    jax.block_until_ready(got)
    ref = jnp.mean((x * weight - tgt * weight) ** 2)
    assert jnp.allclose(got, ref, rtol=1e-5, atol=1e-6), (got, ref)

    # 2) weight=None -> plain MSE.
    got = weighted_mse_loss(x, tgt, None)
    jax.block_until_ready(got)
    ref = jnp.mean((x - tgt) ** 2)
    assert jnp.allclose(got, ref, rtol=1e-5, atol=1e-6), (got, ref)

    # 3) Spatially-varying weight -> full weight-stream path (no pre-multiply).
    w_sp = 0.5 + jax.random.uniform(ks[3], (1, 1, H, W), dtype=jnp.float32)
    got = weighted_mse_loss(x, tgt, w_sp)
    jax.block_until_ready(got)
    ref = jnp.mean((x * w_sp - tgt * w_sp) ** 2)
    assert jnp.allclose(got, ref, rtol=1e-5, atol=1e-6), (got, ref)

    # 4) Multi-tile grid + 2-way core split + ragged tail + dummy-step clamp
    #    (tiny tile override so a small input exercises the big-input paths).
    x4 = jax.random.normal(ks[4], (5, 4, 8, 16), dtype=jnp.float32)
    t4 = jax.random.normal(ks[5], (5, 4, 8, 16), dtype=jnp.float32)
    w4 = 0.5 + jax.random.uniform(ks[6], (1, 4, 1, 1), dtype=jnp.float32)
    got = weighted_mse_loss(x4, t4, w4, tile_bytes=4096)
    jax.block_until_ready(got)
    ref = jnp.mean((x4 * w4 - t4 * w4) ** 2)
    assert jnp.allclose(got, ref, rtol=1e-5, atol=1e-6), (got, ref)

    # 5) Accumulator row-folding (tile_rows > acc_rows) with a row scale.
    x5 = jax.random.normal(ks[7], (8, 4, 4, 64), dtype=jnp.float32)
    t5 = x5 * 0.75
    w5 = jnp.linspace(0.5, 1.5, 4).reshape(1, 4, 1, 1).astype(jnp.float32)
    got = weighted_mse_loss(x5, t5, w5, tile_bytes=32 * 1024)
    jax.block_until_ready(got)
    ref = jnp.mean((x5 * w5 - t5 * w5) ** 2)
    assert jnp.allclose(got, ref, rtol=1e-5, atol=1e-6), (got, ref)

    print("KERNEL_OK")
</pallas_src>

<mosaic_0001>
module attributes {stable_mosaic.version = 11 : i64} {
  func.func @_wmse_kernel(%arg0: i32, %arg1: i32, %arg2: memref<8x1xf32, #tpu.memory_space<vmem>>, %arg3: memref<8x256xf32, #tpu.memory_space<vmem>>, %arg4: memref<8x256xf32, #tpu.memory_space<vmem>>, %arg5: memref<8x128xf32, #tpu.memory_space<vmem>>, %arg6: memref<8x256xf32, #tpu.memory_space<vmem>>) attributes {dimension_semantics = [#tpu.dimension_semantics<parallel>, #tpu.dimension_semantics<arbitrary>], iteration_bounds = array<i64: 1, 1>, scalar_prefetch = 0 : i64, scratch_operands = 1 : i64, tpu.core_type = #tpu.core_type<tc>, window_params = [{transform_indices = @transform_0, window_bounds = array<i64: 8, 1>}, {transform_indices = @transform_1, window_bounds = array<i64: 8, 256>}, {transform_indices = @transform_2, window_bounds = array<i64: 8, 256>}, {transform_indices = @transform_3, window_bounds = array<i64: 8, 128>}]} {
    %c0_i32 = arith.constant 0 : i32
    %0 = arith.cmpi eq, %arg1, %c0_i32 : i32
    %1 = arith.extui %0 : i1 to i32
    %c0_i32_0 = arith.constant 0 : i32
    %2 = arith.cmpi ne, %1, %c0_i32_0 : i32
    scf.if %2 {
      %cst = arith.constant 0.000000e+00 : f32
      %16 = vector.broadcast %cst : f32 to vector<8x256xf32>
      %c0_12 = arith.constant 0 : index
      %c0_13 = arith.constant 0 : index
      %17 = vector.load %arg6[%c0_12, %c0_13] : memref<8x256xf32, #tpu.memory_space<vmem>>, vector<8x256xf32>
      tpu.vector_store %arg6[%c0_12, %c0_13], %16 {strides = array<i32>} : memref<8x256xf32, #tpu.memory_space<vmem>>, vector<8x256xf32>,
    } else {
    }
    %c0 = arith.constant 0 : index
    %c0_1 = arith.constant 0 : index
    %3 = vector.load %arg3[%c0, %c0_1] : memref<8x256xf32, #tpu.memory_space<vmem>>, vector<8x256xf32>
    %c0_2 = arith.constant 0 : index
    %c0_3 = arith.constant 0 : index
    %4 = vector.load %arg4[%c0_2, %c0_3] : memref<8x256xf32, #tpu.memory_space<vmem>>, vector<8x256xf32>
    %5 = arith.subf %3, %4 : vector<8x256xf32>
    %6 = arith.mulf %5, %5 : vector<8x256xf32>
    %c0_4 = arith.constant 0 : index
    %c0_5 = arith.constant 0 : index
    %7 = vector.load %arg2[%c0_4, %c0_5] : memref<8x1xf32, #tpu.memory_space<vmem>>, vector<8x1xf32>
    %8 = vector.broadcast %7 : vector<8x1xf32> to vector<8x256xf32>
    %9 = arith.mulf %6, %8 : vector<8x256xf32>
    %c0_6 = arith.constant 0 : index
    %c0_7 = arith.constant 0 : index
    %10 = vector.load %arg6[%c0_6, %c0_7] : memref<8x256xf32, #tpu.memory_space<vmem>>, vector<8x256xf32>
    %11 = arith.addf %10, %9 : vector<8x256xf32>
    %c0_8 = arith.constant 0 : index
    %c0_9 = arith.constant 0 : index
    %12 = vector.load %arg6[%c0_8, %c0_9] : memref<8x256xf32, #tpu.memory_space<vmem>>, vector<8x256xf32>
    tpu.vector_store %arg6[%c0_8, %c0_9], %11 {strides = array<i32>} : memref<8x256xf32, #tpu.memory_space<vmem>>, vector<8x256xf32>,
    %c0_i32_10 = arith.constant 0 : i32
    %13 = arith.cmpi eq, %arg1, %c0_i32_10 : i32
    %14 = arith.extui %13 : i1 to i32
    %c0_i32_11 = arith.constant 0 : i32
    %15 = arith.cmpi ne, %14, %c0_i32_11 : i32
    scf.if %15 {
      %c0_12 = arith.constant 0 : index
      %c0_13 = arith.constant 0 : index
      %16 = vector.load %arg6[%c0_12, %c0_13] : memref<8x256xf32, #tpu.memory_space<vmem>>, vector<8x256xf32>
      %17 = vector.shape_cast %16 : vector<8x256xf32> to vector<1x8x256xf32>
      %cst = arith.constant dense<0.000000e+00> : vector<1xf32>
      %18 = vector.multi_reduction <add>, %17, %cst [1, 2] : vector<1x8x256xf32> to vector<1xf32>
      %19 = vector.shape_cast %18 : vector<1xf32> to vector<1x1x1xf32>
      %20 = vector.extract %19[0, 0, 0] : f32 from vector<1x1x1xf32>
      %cst_14 = arith.constant 4.8828125E-4 : f32
      %21 = arith.mulf %20, %cst_14 : f32
      %22 = vector.broadcast %21 : f32 to vector<1x1xf32>
      %23 = vector.shape_cast %22 : vector<1x1xf32> to vector<1x1xf32>
      %24 = vector.broadcast %23 : vector<1x1xf32> to vector<8x128xf32>
      %c0_15 = arith.constant 0 : index
      %c0_16 = arith.constant 0 : index
      %25 = vector.load %arg5[%c0_15, %c0_16] : memref<8x128xf32, #tpu.memory_space<vmem>>, vector<8x128xf32>
      tpu.vector_store %arg5[%c0_15, %c0_16], %24 {strides = array<i32>} : memref<8x128xf32, #tpu.memory_space<vmem>>, vector<8x128xf32>,
    } else {
    }
    return
  }
  func.func @transform_0(%arg0: i32, %arg1: i32) -> (i32, i32) {
    %c1_i32 = arith.constant 1 : i32
    %0 = arith.muli %arg0, %c1_i32 : i32
    %1 = arith.addi %0, %arg1 : i32
    %c0_i32 = arith.constant 0 : i32
    %c0_i32_0 = arith.constant 0 : i32
    return %1, %c0_i32 : i32, i32
  }
  func.func @transform_1(%arg0: i32, %arg1: i32) -> (i32, i32) {
    %c1_i32 = arith.constant 1 : i32
    %0 = arith.muli %arg0, %c1_i32 : i32
    %1 = arith.addi %0, %arg1 : i32
    %c0_i32 = arith.constant 0 : i32
    %c0_i32_0 = arith.constant 0 : i32
    return %1, %c0_i32 : i32, i32
  }
  func.func @transform_2(%arg0: i32, %arg1: i32) -> (i32, i32) {
    %c1_i32 = arith.constant 1 : i32
    %0 = arith.muli %arg0, %c1_i32 : i32
    %1 = arith.addi %0, %arg1 : i32
    %c0_i32 = arith.constant 0 : i32
    %c0_i32_0 = arith.constant 0 : i32
    return %1, %c0_i32 : i32, i32
  }
  func.func @transform_3(%arg0: i32, %arg1: i32) -> (i32, i32) {
    %c0_i32 = arith.constant 0 : i32
    %c0_i32_0 = arith.constant 0 : i32
    return %arg0, %c0_i32 : i32, i32
  }
}

</mosaic_0001>

<llo_original>
// kernel: tpu_custom_call.1
$region0: #{tpu_custom_call.1}
  #allocation0 [shape = 'u32[]', space=smem, size = 0x4, offset = 0x4, fixed_abs, tag = 'smem constant byte address 0x4 - core index']
  #allocation1 [shape = 'u32[72,128]{1,0:T(1,128)}', space=vmem, size = 0x9000, scoped, tag = 'internal scratch']
  #allocation2 [shape = 'f32[8,256]{1,0:T(8,128)}', space=vmem, size = 0x2000, scoped, tag = 'scratch operand']
  %s0 = inlined_call_operand.vmem [shape: f32[8,1], index: 0, kind: input, shape index: {}]
  %s1 = inlined_call_operand.hbm [shape: f32[8,256], index: 1, kind: input, shape index: {}]
  %s2 = inlined_call_operand.hbm [shape: f32[8,256], index: 2, kind: input, shape index: {}]
  %s3 = inlined_call_operand.hbm [shape: f32[8,128], index: 3, kind: output, shape index: {}]
  %s4 = sld [smem:[#allocation0]]
  $region38: #{tpu_custom_call.1} parent=0
    _
  %s6 = ssub.s32 1, %s4
  %s7 = scalar_select 0, %s6, %s4
  $region1: #{tpu_custom_call.1} parent=0
    #allocation3 [shape = 'u8[8192]{0}', space=vmem, size = 0x2000, scoped, tag = 'input window, operand 1, single buffered']
    #allocation4 [shape = 's32[1]{0}', space=sflag, size = 0x4, scoped, tag = 'scoped memory for tpu_custom_call.1']
    #allocation5 [shape = 's32[1]{0}', space=sflag, size = 0x4, scoped, tag = 'scoped memory for tpu_custom_call.1']
    #allocation6 [shape = 'u8[8192]{0}', space=vmem, size = 0x2000, scoped, tag = 'input window, operand 2, single buffered']
    #allocation7 [shape = 's32[1]{0}', space=sflag, size = 0x4, scoped, tag = 'scoped memory for tpu_custom_call.1']
    #allocation8 [shape = 'u8[4096]{0}', space=vmem, size = 0x1000, scoped, tag = 'output window, operand 0, single buffered']
    %8 = vsyncpa [#allocation4], 0
    %9 = vsyncpa [#allocation7], 0
    %10 = vsyncpa [#allocation5], 0
    // Predicated region
    $region2: #{tpu_custom_call.1} parent=1 // pred_check
      _
    $region3: #{tpu_custom_call.1} parent=1 // pred_check_branch
      %12 = sbr.rel (0) target = $region5
    $region4: #{tpu_custom_call.1} parent=1 // pred_region
      %s13 = sadd.s32 0, 0
      %p14 = scmp.lt.s32.totalorder %s13, 0
      %s15 = scalar_select %p14, %s13, 0
      %s16 = smul.addr %s15, 8
      %s17 = scalar_lea.vmem %s0, %s16
      %s18 = sadd.s32 0, 0
    $region5: #{tpu_custom_call.1} parent=1 // pred_fallthru
      _
    // Predicated region
    $region6: #{tpu_custom_call.1} parent=1 // pred_check
      _
    $region7: #{tpu_custom_call.1} parent=1 // pred_check_branch
      %20 = sbr.rel (0) target = $region9
    $region8: #{tpu_custom_call.1} parent=1 // pred_region
      %s21 = sadd.s32 0, 0
      %23 = vsyncadd [#allocation4], 0
      %s24 = smul.addr %s21, 2
      %s25 = smul.addr %s24, 8
      %s26 = scalar_lea.hbm %s1, %s25
      %s28 = sshll.u32 %s26, 4
      %s29 = int_to_ptr.hbm [resolvable:$true] %s28
      %s30 = sshll.u32 [#allocation3], 4
      %s31 = int_to_ptr.vmem [resolvable:$true] %s30
      %33 = dma.hbm_to_vmem [thread:$0]  %s29, 256, %s31, [#allocation4]
    $region9: #{tpu_custom_call.1} parent=1 // pred_fallthru
      _
    // Predicated region
    $region10: #{tpu_custom_call.1} parent=1 // pred_check
      _
    $region11: #{tpu_custom_call.1} parent=1 // pred_check_branch
      %35 = sbr.rel (0) target = $region13
    $region12: #{tpu_custom_call.1} parent=1 // pred_region
      %s36 = sadd.s32 0, 0
      %38 = vsyncadd [#allocation7], 0
      %s39 = smul.addr %s36, 2
      %s40 = smul.addr %s39, 8
      %s41 = scalar_lea.hbm %s2, %s40
      %s43 = sshll.u32 %s41, 4
      %s44 = int_to_ptr.hbm [resolvable:$true] %s43
      %s45 = sshll.u32 [#allocation6], 4
      %s46 = int_to_ptr.vmem [resolvable:$true] %s45
      %48 = dma.hbm_to_vmem [thread:$0]  %s44, 256, %s46, [#allocation7]
    $region13: #{tpu_custom_call.1} parent=1 // pred_fallthru
      _
    // Predicated region
    $region14: #{tpu_custom_call.1} parent=1 // pred_check
      _
    $region15: #{tpu_custom_call.1} parent=1 // pred_check_branch
      %50 = sbr.rel (0) target = $region17
    $region16: #{tpu_custom_call.1} parent=1 // pred_region
      %52 = dma.done [#allocation4], 256
    $region17: #{tpu_custom_call.1} parent=1 // pred_fallthru
      _
    // Predicated region
    $region18: #{tpu_custom_call.1} parent=1 // pred_check
      _
    $region19: #{tpu_custom_call.1} parent=1 // pred_check_branch
      %54 = sbr.rel (0) target = $region21
    $region20: #{tpu_custom_call.1} parent=1 // pred_region
      %56 = dma.done [#allocation7], 256
    $region21: #{tpu_custom_call.1} parent=1 // pred_fallthru
      _
    %s57 = sadd.s32 0, 0
    %p58 = scmp.lt.s32.totalorder %s57, 0
    %s59 = scalar_select %p58, %s57, 0
    %s60 = smul.addr %s59, 8
    %s61 = scalar_lea.vmem %s0, %s60
    %s62 = sadd.s32 0, 0
    %p63 = scmp.lt.s32.totalorder %s62, 0
    %s64 = scalar_select %p63, %s62, 0
    %s65 = smul.addr %s64, 8
    %s66 = scalar_lea.vmem %s0, %s65
    %s67 = sadd.s32 0, 0
    %s68 = sadd.s32 0, 0
    %s69 = sadd.s32 0, 0
    %p70 = scmp.eq.s32.totalorder 0, 0
    // Predicated region
    $region22: #{tpu_custom_call.1} parent=1 // pred_check
      %p71 = pneg %p70
    $region23: #{tpu_custom_call.1} parent=1 // pred_check_branch
      %73 = sbr.rel (%p71) target = $region25
    $region24: #{tpu_custom_call.1} parent=1 // pred_region
      %74 = vst [vmem:[#allocation2] sm:$0xff] 0.0
      %75 = vst [vmem:[#allocation2 + $0x8] sm:$0xff] 0.0
    $region25: #{tpu_custom_call.1} parent=1 // pred_fallthru
      _
    %v76 = vld [vmem:[#allocation3] sm:$0xff]
    %v77 = vld [vmem:[#allocation3 + $0x8] sm:$0xff]
    %v78 = vld [vmem:[#allocation6] sm:$0xff]
    %v79 = vld [vmem:[#allocation6 + $0x8] sm:$0xff]
    %v80 = vsub.f32 %v76, %v78
    %v81 = vsub.f32 %v77, %v79
    %v82 = vmul.f32 %v80, %v80
    %v83 = vmul.f32 %v81, %v81
    %v84 = vld [vmem:[%s66] sm:$0xff]
    %86 = vset.pattern.permute.xlu0 0
    %87 = vperm.xlu0 %86, %v84
    %v88 = vpop.permute.xlu0 %87
    %v90 = vmul.f32 %v82, %v88
    %v91 = vmul.f32 %v83, %v88
    %v92 = vld [vmem:[#allocation2] sm:$0xff]
    %v93 = vld [vmem:[#allocation2 + $0x8] sm:$0xff]
    %v94 = vadd.f32 %v92, %v90
    %v95 = vadd.f32 %v93, %v91
    %96 = vst [vmem:[#allocation2] sm:$0xff] %v94
    %97 = vst [vmem:[#allocation2 + $0x8] sm:$0xff] %v95
    // Predicated region
    $region26: #{tpu_custom_call.1} parent=1 // pred_check
      %p98 = pneg %p70
    $region27: #{tpu_custom_call.1} parent=1 // pred_check_branch
      %100 = sbr.rel (%p98) target = $region29
    $region28: #{tpu_custom_call.1} parent=1 // pred_region
      %v101 = vld [vmem:[#allocation2] sm:$0xff]
      %v102 = vld [vmem:[#allocation2 + $0x8] sm:$0xff]
      %v103 = vadd.f32 %v101, %v102
      %104 = vadd.xlane.f32.xlu0 %v103
      %v105 = vpop.xlane.xlu0 %104
      %v106 = vrot.slane %v105, 4
      %v107 = vadd.f32 %v105, %v106
      %v108 = vrot.slane %v107, 2
      %v109 = vadd.f32 %v107, %v108
      %v110 = vrot.slane %v109, 1
      %v111 = vadd.f32 %v109, %v110
      %s112 = vtos %v111
      %s113 = smul.f32 %s112, 0.00048828125
      %v114 = vstv %s113
      %115 = vst [vmem:[#allocation8] sm:$0xff] %v114
    $region29: #{tpu_custom_call.1} parent=1 // pred_fallthru
      _
    // Predicated region
    $region30: #{tpu_custom_call.1} parent=1 // pred_check
      _
    $region31: #{tpu_custom_call.1} parent=1 // pred_check_branch
      %117 = sbr.rel (0) target = $region33
    $region32: #{tpu_custom_call.1} parent=1 // pred_region
      %119 = vsyncadd [#allocation5], 0
      %s121 = sshll.u32 [#allocation8], 4
      %s122 = int_to_ptr.vmem [resolvable:$true] %s121
      %s123 = sshll.u32 %s3, 4
      %s124 = int_to_ptr.hbm [resolvable:$true] %s123
      %126 = dma.vmem_to_hbm [thread:$0]  %s122, 128, %s124, [#allocation5]
    $region33: #{tpu_custom_call.1} parent=1 // pred_fallthru
      _
    // Predicated region
    $region34: #{tpu_custom_call.1} parent=1 // pred_check
      _
    $region35: #{tpu_custom_call.1} parent=1 // pred_check_branch
      %128 = sbr.rel (0) target = $region37
    $region36: #{tpu_custom_call.1} parent=1 // pred_region
      %130 = dma.done [#allocation5], 128
    $region37: #{tpu_custom_call.1} parent=1 // pred_fallthru
      _
    %131 = vsyncpa [#allocation4], 1
    %132 = vsyncpa [#allocation7], 1
    %133 = vsyncpa [#allocation5], 1

</llo_original>
